<compile_context>
chip_gen: v7x
topology: tpu7x:2x2x1
jax: 0.10.0
libtpu: 0.0.40
codegen_flags: <defaults>
</compile_context>

<pallas_src>
import jax
import jax.numpy as jnp
from jax import lax
from jax.experimental import pallas as pl
from jax.experimental.pallas import tpu as pltpu

HIDDEN = 128  # every hidden layer is padded to 128 lanes


def mlp_kernel(x_ref, w1_ref, b1_ref, w2_ref, b2_ref, w3_ref, b3_ref,
               w4t_ref, o_ref):
    # Cast x f32 -> bf16 on the VPU (cheap); avoids a separate wrapper cast pass.
    xb = x_ref[...].astype(jnp.bfloat16)

    # fc1 + ReLU  (bf16 operands, f32 MXU accumulation)
    h = jnp.dot(xb, w1_ref[...], preferred_element_type=jnp.float32)
    h = jnp.maximum(h + b1_ref[...], 0.0)
    # dropout(p=0.3): identity in eval mode.
    # TODO(synk): training-mode stochastic dropout intentionally omitted.

    # fc2 + ReLU (lanes 64..127 are zero-padded -> stay exactly 0)
    h = jnp.dot(h.astype(jnp.bfloat16), w2_ref[...], preferred_element_type=jnp.float32)
    h = jnp.maximum(h + b2_ref[...], 0.0)

    # fc3 + ReLU (lanes 32..126 zero-padded; lane 127 is the "bias lane", forced to 1.0)
    h = jnp.dot(h.astype(jnp.bfloat16), w3_ref[...], preferred_element_type=jnp.float32)
    h = jnp.maximum(h + b3_ref[...], 0.0)

    # fc4 as a lane-dense row: contract the 128 feature lanes of h against the (1, 128)
    # w4 row (NT dot_general) -> (1, tile) with batch rows on lanes.  w4t lane 127 holds
    # b4 and multiplies the constant-1 bias lane of h, so the bias is added for free.
    logits = lax.dot_general(
        w4t_ref[...], h.astype(jnp.bfloat16),
        dimension_numbers=(((1,), (1,)), ((), ())),
        preferred_element_type=jnp.float32)          # (1, tile)

    # Numerically stable sigmoid over only `tile` elements (EUP cost is negligible now).
    z = jnp.exp(-jnp.abs(logits))                    # in (0, 1], never overflows
    inv = 1.0 / (1.0 + z)
    o_ref[...] = jnp.where(logits >= 0.0, inv, z * inv)


def _round_up(n, m):
    return ((n + m - 1) // m) * m


def _pack_params(params, input_dim):
    """Zero-pad every layer to HIDDEN (=128) lanes, cast weights to bf16, keep biases f32.

    Padded cols/rows/bias lanes are zero so padded lanes carry exact zeros through ReLU.
    fc4 is packed transposed as a (1, 128) row; its lane 127 carries b4 and pairs with a
    constant-1 "bias lane" injected into the layer-3 output (b3 lane 127 := 1, w3 col 127
    all-zero), which folds the final bias into the matmul."""
    f32 = jnp.float32

    def pad2(a, rows, cols):
        out = jnp.zeros((rows, cols), f32)
        return out.at[: a.shape[0], : a.shape[1]].set(a.astype(f32))

    w1 = pad2(params["w1"], input_dim, HIDDEN).astype(jnp.bfloat16)
    w2 = pad2(params["w2"], HIDDEN, HIDDEN).astype(jnp.bfloat16)
    w3 = pad2(params["w3"], HIDDEN, HIDDEN).astype(jnp.bfloat16)
    b1 = pad2(params["b1"], 1, HIDDEN)
    b2 = pad2(params["b2"], 1, HIDDEN)
    # Bias lane: layer-3 output lane 127 becomes relu(0 + 1.0) == 1.0 for every row.
    b3 = pad2(params["b3"], 1, HIDDEN).at[0, HIDDEN - 1].set(1.0)
    w4t = pad2(params["w4"].T, 1, HIDDEN)
    w4t = w4t.at[0, HIDDEN - 1].set(params["b4"].reshape(()).astype(f32))
    w4t = w4t.astype(jnp.bfloat16)
    return w1, b1, w2, b2, w3, b3, w4t


def nba_point_model(x, params, *, batch_tile=4096):
    """x: (B, input_dim) float32.  params: dict of w1..w4 (in,out) and b1..b4 (1,out).

    Returns (B, 1) float32 sigmoid outputs.

    batch_tile: rows per grid step (rounded to a multiple of 128, capped at ceil(B/2) so
    the parallel grid axis has >= 2 steps for moderate/large batches -> both v7x cores get
    work).  At the default 4096 the per-step VMEM footprint (f32 x tile + a few padded
    128-lane activations + ~75 KiB of weights + a (1, tile) output row) stays comfortably
    under the 16/32/32 MiB scoped-VMEM defaults on v5e/v6e/v7x, so no explicit
    vmem_limit_bytes is needed.
    """
    B, D = x.shape

    # Tile must be a multiple of 128 so the lane-dense (1, tile) output block satisfies
    # the 128-lane divisibility rule; cap at ceil(B/2) for >= 2 grid steps when possible.
    half_b = _round_up((B + 1) // 2, 128)
    tile = max(128, min(_round_up(batch_tile, 128), half_b))
    B_pad = _round_up(B, tile)
    grid = (B_pad // tile,)

    # Only materialize a padded copy of x for ragged batches; otherwise the kernel reads
    # the original f32 array directly (4 B/elem, no extra wrapper pass).
    if B_pad != B:
        x_in = jnp.zeros((B_pad, D), x.dtype).at[:B].set(x)
    else:
        x_in = x

    packed = _pack_params(params, D)

    def x_map(i):
        return (i, 0)

    def const_map(i):
        # Constant block index -> Pallas does not re-issue the DMA on subsequent steps.
        return (0, 0)

    in_specs = [pl.BlockSpec((tile, D), x_map)]
    in_specs += [pl.BlockSpec(p.shape, const_map) for p in packed]

    out = pl.pallas_call(
        mlp_kernel,
        out_shape=jax.ShapeDtypeStruct((1, B_pad), jnp.float32),
        grid_spec=pltpu.PrefetchScalarGridSpec(
            num_scalar_prefetch=0,
            grid=grid,
            in_specs=in_specs,
            # Lane-dense output: each step writes a disjoint (1, tile) lane block of row 0.
            out_specs=pl.BlockSpec((1, tile), lambda i: (0, i)),
        ),
        compiler_params=pltpu.CompilerParams(
            dimension_semantics=("parallel",),
        ),
    )(x_in, *packed)

    # ~B*4 bytes sliced from a (1, B_pad) row (vs a second pass over a (B_pad, 128) slab).
    return out[0, :B].reshape(B, 1)


def init_params(key, input_dim):
    """Deterministic init mimicking nn.Linear default (uniform(-1/sqrt(in), 1/sqrt(in)))."""
    dims = [(input_dim, 128), (128, 64), (64, 32), (32, 1)]
    params = {}
    for idx, (din, dout) in enumerate(dims, start=1):
        key, kw, kb = jax.random.split(key, 3)
        bound = 1.0 / jnp.sqrt(jnp.float32(din))
        params[f"w{idx}"] = jax.random.uniform(
            kw, (din, dout), jnp.float32, minval=-bound, maxval=bound)
        params[f"b{idx}"] = jax.random.uniform(
            kb, (1, dout), jnp.float32, minval=-bound, maxval=bound)
    return params


def reference_packed(x, params):
    """Pure-JAX reference using the exact same padded/bf16 parameters and math."""
    D = x.shape[1]
    w1, b1, w2, b2, w3, b3, w4t = _pack_params(params, D)
    h = jnp.maximum(jnp.dot(x.astype(jnp.bfloat16), w1,
                            preferred_element_type=jnp.float32) + b1, 0.0)
    h = jnp.maximum(jnp.dot(h.astype(jnp.bfloat16), w2,
                            preferred_element_type=jnp.float32) + b2, 0.0)
    h = jnp.maximum(jnp.dot(h.astype(jnp.bfloat16), w3,
                            preferred_element_type=jnp.float32) + b3, 0.0)
    logits = lax.dot_general(w4t, h.astype(jnp.bfloat16),
                             dimension_numbers=(((1,), (1,)), ((), ())),
                             preferred_element_type=jnp.float32)      # (1, B)
    return jax.nn.sigmoid(logits)[0].reshape(-1, 1)


def reference_f32(x, params):
    """Full-f32 forward pass of the original module (eval mode)."""
    h = jnp.maximum(x @ params["w1"] + params["b1"], 0.0)
    h = jnp.maximum(h @ params["w2"] + params["b2"], 0.0)
    h = jnp.maximum(h @ params["w3"] + params["b3"], 0.0)
    return jax.nn.sigmoid(h @ params["w4"] + params["b4"])


if __name__ == "__main__":
    key = jax.random.PRNGKey(0)
    input_dim = 32
    batch = 16

    k_x, k_p = jax.random.split(key)
    x = jax.random.normal(k_x, (batch, input_dim), jnp.float32)
    params = init_params(k_p, input_dim)

    out = jax.block_until_ready(nba_point_model(x, params))
    assert out.shape == (batch, 1)

    # Tight check vs a reference with identical padding/bf16 casts.
    assert jnp.allclose(out, reference_packed(x, params), atol=2e-3, rtol=2e-3), \
        "mismatch vs bf16 reference"
    # Loose sanity check vs the full-f32 forward pass (bf16 dot-input error budget).
    assert jnp.allclose(out, reference_f32(x, params), atol=5e-2, rtol=0.0), \
        "mismatch vs f32 reference"

    # Ragged batch: multi-step grid + batch-padding path.
    x2 = jax.random.normal(jax.random.PRNGKey(1), (200, input_dim), jnp.float32)
    out2 = jax.block_until_ready(nba_point_model(x2, params))
    assert out2.shape == (200, 1)
    assert jnp.allclose(out2, reference_packed(x2, params), atol=2e-3, rtol=2e-3), \
        "mismatch vs bf16 reference (ragged batch)"

    # Larger batch: no-pad fast path (x passed straight through), bigger tile, 2 grid steps.
    x3 = jax.random.normal(jax.random.PRNGKey(2), (4096, input_dim), jnp.float32)
    out3 = jax.block_until_ready(nba_point_model(x3, params, batch_tile=2048))
    assert out3.shape == (4096, 1)
    assert jnp.allclose(out3, reference_packed(x3, params), atol=2e-3, rtol=2e-3), \
        "mismatch vs bf16 reference (large batch)"

    print("KERNEL_OK")
</pallas_src>

<mosaic_0001>
module attributes {stable_mosaic.version = 11 : i64} {
  func.func @mlp_kernel(%arg0: i32, %arg1: memref<128x32xf32, #tpu.memory_space<vmem>>, %arg2: memref<32x128xbf16, #tpu.memory_space<vmem>>, %arg3: memref<1x128xf32, #tpu.memory_space<vmem>>, %arg4: memref<128x128xbf16, #tpu.memory_space<vmem>>, %arg5: memref<1x128xf32, #tpu.memory_space<vmem>>, %arg6: memref<128x128xbf16, #tpu.memory_space<vmem>>, %arg7: memref<1x128xf32, #tpu.memory_space<vmem>>, %arg8: memref<1x128xbf16, #tpu.memory_space<vmem>>, %arg9: memref<1x128xf32, #tpu.memory_space<vmem>>) attributes {dimension_semantics = [#tpu.dimension_semantics<parallel>], iteration_bounds = array<i64: 1>, scalar_prefetch = 0 : i64, scratch_operands = 0 : i64, tpu.core_type = #tpu.core_type<tc>, window_params = [{transform_indices = @transform_0, window_bounds = array<i64: 128, 32>}, {pipeline_mode = #tpu.pipeline_mode<synchronous>, transform_indices = @transform_1, window_bounds = array<i64: 32, 128>}, {pipeline_mode = #tpu.pipeline_mode<synchronous>, transform_indices = @transform_2, window_bounds = array<i64: 1, 128>}, {pipeline_mode = #tpu.pipeline_mode<synchronous>, transform_indices = @transform_3, window_bounds = array<i64: 128, 128>}, {pipeline_mode = #tpu.pipeline_mode<synchronous>, transform_indices = @transform_4, window_bounds = array<i64: 1, 128>}, {pipeline_mode = #tpu.pipeline_mode<synchronous>, transform_indices = @transform_5, window_bounds = array<i64: 128, 128>}, {pipeline_mode = #tpu.pipeline_mode<synchronous>, transform_indices = @transform_6, window_bounds = array<i64: 1, 128>}, {pipeline_mode = #tpu.pipeline_mode<synchronous>, transform_indices = @transform_7, window_bounds = array<i64: 1, 128>}, {transform_indices = @transform_8, window_bounds = array<i64: 1, 128>}]} {
    %c0 = arith.constant 0 : index
    %c0_0 = arith.constant 0 : index
    %0 = vector.load %arg1[%c0, %c0_0] : memref<128x32xf32, #tpu.memory_space<vmem>>, vector<128x32xf32>
    %1 = arith.truncf %0 : vector<128x32xf32> to vector<128x32xbf16>
    %c0_1 = arith.constant 0 : index
    %c0_2 = arith.constant 0 : index
    %2 = vector.load %arg2[%c0_1, %c0_2] : memref<32x128xbf16, #tpu.memory_space<vmem>>, vector<32x128xbf16>
    %cst = arith.constant dense<0.000000e+00> : vector<128x128xf32>
    %3 = tpu.matmul %1, %2, %cst {dimension_numbers = #tpu.dot_dimension_numbers<[1], [0], [0], [1], [0, 0, 1, 1], [], []>} : vector<128x32xbf16>, vector<32x128xbf16>, vector<128x128xf32> -> vector<128x128xf32>
    %c0_3 = arith.constant 0 : index
    %c0_4 = arith.constant 0 : index
    %4 = vector.load %arg3[%c0_3, %c0_4] : memref<1x128xf32, #tpu.memory_space<vmem>>, vector<1x128xf32>
    %5 = vector.broadcast %4 : vector<1x128xf32> to vector<128x128xf32>
    %6 = arith.addf %3, %5 : vector<128x128xf32>
    %cst_5 = arith.constant 0.000000e+00 : f32
    %7 = vector.broadcast %cst_5 : f32 to vector<128x128xf32>
    %8 = arith.maximumf %6, %7 : vector<128x128xf32>
    %9 = arith.truncf %8 : vector<128x128xf32> to vector<128x128xbf16>
    %c0_6 = arith.constant 0 : index
    %c0_7 = arith.constant 0 : index
    %10 = vector.load %arg4[%c0_6, %c0_7] : memref<128x128xbf16, #tpu.memory_space<vmem>>, vector<128x128xbf16>
    %cst_8 = arith.constant dense<0.000000e+00> : vector<128x128xf32>
    %11 = tpu.matmul %9, %10, %cst_8 {dimension_numbers = #tpu.dot_dimension_numbers<[1], [0], [0], [1], [0, 0, 1, 1], [], []>} : vector<128x128xbf16>, vector<128x128xbf16>, vector<128x128xf32> -> vector<128x128xf32>
    %c0_9 = arith.constant 0 : index
    %c0_10 = arith.constant 0 : index
    %12 = vector.load %arg5[%c0_9, %c0_10] : memref<1x128xf32, #tpu.memory_space<vmem>>, vector<1x128xf32>
    %13 = vector.broadcast %12 : vector<1x128xf32> to vector<128x128xf32>
    %14 = arith.addf %11, %13 : vector<128x128xf32>
    %cst_11 = arith.constant 0.000000e+00 : f32
    %15 = vector.broadcast %cst_11 : f32 to vector<128x128xf32>
    %16 = arith.maximumf %14, %15 : vector<128x128xf32>
    %17 = arith.truncf %16 : vector<128x128xf32> to vector<128x128xbf16>
    %c0_12 = arith.constant 0 : index
    %c0_13 = arith.constant 0 : index
    %18 = vector.load %arg6[%c0_12, %c0_13] : memref<128x128xbf16, #tpu.memory_space<vmem>>, vector<128x128xbf16>
    %cst_14 = arith.constant dense<0.000000e+00> : vector<128x128xf32>
    %19 = tpu.matmul %17, %18, %cst_14 {dimension_numbers = #tpu.dot_dimension_numbers<[1], [0], [0], [1], [0, 0, 1, 1], [], []>} : vector<128x128xbf16>, vector<128x128xbf16>, vector<128x128xf32> -> vector<128x128xf32>
    %c0_15 = arith.constant 0 : index
    %c0_16 = arith.constant 0 : index
    %20 = vector.load %arg7[%c0_15, %c0_16] : memref<1x128xf32, #tpu.memory_space<vmem>>, vector<1x128xf32>
    %21 = vector.broadcast %20 : vector<1x128xf32> to vector<128x128xf32>
    %22 = arith.addf %19, %21 : vector<128x128xf32>
    %cst_17 = arith.constant 0.000000e+00 : f32
    %23 = vector.broadcast %cst_17 : f32 to vector<128x128xf32>
    %24 = arith.maximumf %22, %23 : vector<128x128xf32>
    %c0_18 = arith.constant 0 : index
    %c0_19 = arith.constant 0 : index
    %25 = vector.load %arg8[%c0_18, %c0_19] : memref<1x128xbf16, #tpu.memory_space<vmem>>, vector<1x128xbf16>
    %26 = arith.truncf %24 : vector<128x128xf32> to vector<128x128xbf16>
    %cst_20 = arith.constant dense<0.000000e+00> : vector<1x128xf32>
    %27 = tpu.matmul %25, %26, %cst_20 {dimension_numbers = #tpu.dot_dimension_numbers<[1], [1], [0], [0], [0, 0, 1, 0], [], []>} : vector<1x128xbf16>, vector<128x128xbf16>, vector<1x128xf32> -> vector<1x128xf32>
    %28 = math.absf %27 : vector<1x128xf32>
    %cst_21 = arith.constant 0.000000e+00 : f32
    %29 = vector.broadcast %cst_21 : f32 to vector<1x128xf32>
    %30 = arith.subf %29, %28 : vector<1x128xf32>
    %31 = math.exp %30 : vector<1x128xf32>
    %cst_22 = arith.constant 1.000000e+00 : f32
    %32 = vector.broadcast %cst_22 : f32 to vector<1x128xf32>
    %33 = arith.addf %32, %31 : vector<1x128xf32>
    %cst_23 = arith.constant 1.000000e+00 : f32
    %34 = vector.broadcast %cst_23 : f32 to vector<1x128xf32>
    %35 = arith.divf %34, %33 : vector<1x128xf32>
    %cst_24 = arith.constant 0.000000e+00 : f32
    %36 = vector.broadcast %cst_24 : f32 to vector<1x128xf32>
    %37 = arith.cmpf oge, %27, %36 : vector<1x128xf32>
    %38 = arith.mulf %31, %35 : vector<1x128xf32>
    %39 = arith.select %37, %35, %38 : vector<1x128xi1>, vector<1x128xf32>
    %c0_25 = arith.constant 0 : index
    %c0_26 = arith.constant 0 : index
    %40 = vector.load %arg9[%c0_25, %c0_26] : memref<1x128xf32, #tpu.memory_space<vmem>>, vector<1x128xf32>
    tpu.vector_store %arg9[%c0_25, %c0_26], %39 {strides = array<i32>} : memref<1x128xf32, #tpu.memory_space<vmem>>, vector<1x128xf32>,
    return
  }
  func.func @transform_0(%arg0: i32) -> (i32, i32) {
    %c0_i32 = arith.constant 0 : i32
    %c0_i32_0 = arith.constant 0 : i32
    return %arg0, %c0_i32 : i32, i32
  }
  func.func @transform_1(%arg0: i32) -> (i32, i32) {
    %c0_i32 = arith.constant 0 : i32
    %c0_i32_0 = arith.constant 0 : i32
    %c0_i32_1 = arith.constant 0 : i32
    return %c0_i32, %c0_i32_0 : i32, i32
  }
  func.func @transform_2(%arg0: i32) -> (i32, i32) {
    %c0_i32 = arith.constant 0 : i32
    %c0_i32_0 = arith.constant 0 : i32
    %c0_i32_1 = arith.constant 0 : i32
    return %c0_i32, %c0_i32_0 : i32, i32
  }
  func.func @transform_3(%arg0: i32) -> (i32, i32) {
    %c0_i32 = arith.constant 0 : i32
    %c0_i32_0 = arith.constant 0 : i32
    %c0_i32_1 = arith.constant 0 : i32
    return %c0_i32, %c0_i32_0 : i32, i32
  }
  func.func @transform_4(%arg0: i32) -> (i32, i32) {
    %c0_i32 = arith.constant 0 : i32
    %c0_i32_0 = arith.constant 0 : i32
    %c0_i32_1 = arith.constant 0 : i32
    return %c0_i32, %c0_i32_0 : i32, i32
  }
  func.func @transform_5(%arg0: i32) -> (i32, i32) {
    %c0_i32 = arith.constant 0 : i32
    %c0_i32_0 = arith.constant 0 : i32
    %c0_i32_1 = arith.constant 0 : i32
    return %c0_i32, %c0_i32_0 : i32, i32
  }
  func.func @transform_6(%arg0: i32) -> (i32, i32) {
    %c0_i32 = arith.constant 0 : i32
    %c0_i32_0 = arith.constant 0 : i32
    %c0_i32_1 = arith.constant 0 : i32
    return %c0_i32, %c0_i32_0 : i32, i32
  }
  func.func @transform_7(%arg0: i32) -> (i32, i32) {
    %c0_i32 = arith.constant 0 : i32
    %c0_i32_0 = arith.constant 0 : i32
    %c0_i32_1 = arith.constant 0 : i32
    return %c0_i32, %c0_i32_0 : i32, i32
  }
  func.func @transform_8(%arg0: i32) -> (i32, i32) {
    %c0_i32 = arith.constant 0 : i32
    %c0_i32_0 = arith.constant 0 : i32
    return %c0_i32, %arg0 : i32, i32
  }
}

</mosaic_0001>

<llo_original>
// kernel: tpu_custom_call.1
$region0: #{tpu_custom_call.1}
  #allocation0 [shape = 'u32[]', space=smem, size = 0x4, offset = 0x4, fixed_abs, tag = 'smem constant byte address 0x4 - core index']
  #allocation1 [shape = 'u32[144,128]{1,0:T(1,128)}', space=vmem, size = 0x12000, scoped, tag = 'internal scratch']
  %s0 = inlined_call_operand.vmem [shape: f32[128,32], index: 0, kind: input, shape index: {}]
  %s1 = inlined_call_operand.vmem [shape: bf16[32,128], index: 1, kind: input, shape index: {}]
  %s2 = inlined_call_operand.vmem [shape: f32[1,128], index: 2, kind: input, shape index: {}]
  %s3 = inlined_call_operand.vmem [shape: bf16[128,128], index: 3, kind: input, shape index: {}]
  %s4 = inlined_call_operand.vmem [shape: f32[1,128], index: 4, kind: input, shape index: {}]
  %s5 = inlined_call_operand.vmem [shape: bf16[128,128], index: 5, kind: input, shape index: {}]
  %s6 = inlined_call_operand.vmem [shape: f32[1,128], index: 6, kind: input, shape index: {}]
  %s7 = inlined_call_operand.vmem [shape: bf16[1,128], index: 7, kind: input, shape index: {}]
  %s8 = inlined_call_operand.hbm [shape: f32[1,128], index: 8, kind: output, shape index: {}]
  %s9 = sld [smem:[#allocation0]]
  $region42: #{tpu_custom_call.1} parent=0
    _
  %s11 = ssub.s32 1, %s9
  %s12 = scalar_select 0, %s11, %s9
  $region1: #{tpu_custom_call.1} parent=0
    #allocation2 [shape = 'u8[512]{0}', space=vmem, size = 0x400, scoped, tag = 'output window, operand 0, single buffered']
    #allocation3 [shape = 's32[1]{0}', space=sflag, size = 0x4, scoped, tag = 'scoped memory for tpu_custom_call.1']
    %13 = vsyncpa [#allocation3], 0
    // Predicated region
    $region2: #{tpu_custom_call.1} parent=1 // pred_check
      _
    $region3: #{tpu_custom_call.1} parent=1 // pred_check_branch
      %15 = sbr.rel (0) target = $region5
    $region4: #{tpu_custom_call.1} parent=1 // pred_region
      _
    $region5: #{tpu_custom_call.1} parent=1 // pred_fallthru
      _
    // Predicated region
    $region6: #{tpu_custom_call.1} parent=1 // pred_check
      _
    $region7: #{tpu_custom_call.1} parent=1 // pred_check_branch
      %17 = sbr.rel (0) target = $region9
    $region8: #{tpu_custom_call.1} parent=1 // pred_region
      _
    $region9: #{tpu_custom_call.1} parent=1 // pred_fallthru
      _
    // Predicated region
    $region10: #{tpu_custom_call.1} parent=1 // pred_check
      _
    $region11: #{tpu_custom_call.1} parent=1 // pred_check_branch
      %19 = sbr.rel (0) target = $region13
    $region12: #{tpu_custom_call.1} parent=1 // pred_region
      _
    $region13: #{tpu_custom_call.1} parent=1 // pred_fallthru
      _
    // Predicated region
    $region14: #{tpu_custom_call.1} parent=1 // pred_check
      _
    $region15: #{tpu_custom_call.1} parent=1 // pred_check_branch
      %21 = sbr.rel (0) target = $region17
    $region16: #{tpu_custom_call.1} parent=1 // pred_region
      _
    $region17: #{tpu_custom_call.1} parent=1 // pred_fallthru
      _
    // Predicated region
    $region18: #{tpu_custom_call.1} parent=1 // pred_check
      _
    $region19: #{tpu_custom_call.1} parent=1 // pred_check_branch
      %23 = sbr.rel (0) target = $region21
    $region20: #{tpu_custom_call.1} parent=1 // pred_region
      _
    $region21: #{tpu_custom_call.1} parent=1 // pred_fallthru
      _
    // Predicated region
    $region22: #{tpu_custom_call.1} parent=1 // pred_check
      _
    $region23: #{tpu_custom_call.1} parent=1 // pred_check_branch
      %25 = sbr.rel (0) target = $region25
    $region24: #{tpu_custom_call.1} parent=1 // pred_region
      _
    $region25: #{tpu_custom_call.1} parent=1 // pred_fallthru
      _
    // Predicated region
    $region26: #{tpu_custom_call.1} parent=1 // pred_check
      _
    $region27: #{tpu_custom_call.1} parent=1 // pred_check_branch
      %27 = sbr.rel (0) target = $region29
    $region28: #{tpu_custom_call.1} parent=1 // pred_region
      _
    $region29: #{tpu_custom_call.1} parent=1 // pred_fallthru
      _
    // Predicated region
    $region30: #{tpu_custom_call.1} parent=1 // pred_check
      _
    $region31: #{tpu_custom_call.1} parent=1 // pred_check_branch
      %29 = sbr.rel (0) target = $region33
    $region32: #{tpu_custom_call.1} parent=1 // pred_region
      _
    $region33: #{tpu_custom_call.1} parent=1 // pred_fallthru
      _
    %v31 = vld [vmem:[%s0] sm:$0xff]
    %v32 = vld [vmem:[%s0 + $0x8] sm:$0xff]
    %v33 = vld [vmem:[%s0 + $0x10] sm:$0xff]
    %v34 = vld [vmem:[%s0 + $0x18] sm:$0xff]
    %v35 = vld [vmem:[%s0 + $0x20] sm:$0xff]
    %v36 = vld [vmem:[%s0 + $0x28] sm:$0xff]
    %v37 = vld [vmem:[%s0 + $0x30] sm:$0xff]
    %v38 = vld [vmem:[%s0 + $0x38] sm:$0xff]
    %v39 = vld [vmem:[%s0 + $0x40] sm:$0xff]
    %v40 = vld [vmem:[%s0 + $0x48] sm:$0xff]
    %v41 = vld [vmem:[%s0 + $0x50] sm:$0xff]
    %v42 = vld [vmem:[%s0 + $0x58] sm:$0xff]
    %v43 = vld [vmem:[%s0 + $0x60] sm:$0xff]
    %v44 = vld [vmem:[%s0 + $0x68] sm:$0xff]
    %v45 = vld [vmem:[%s0 + $0x70] sm:$0xff]
    %v46 = vld [vmem:[%s0 + $0x78] sm:$0xff]
    %v47 = vpack.c.bf16 %v32, %v31
    %v48 = vpack.c.bf16 %v34, %v33
    %v49 = vpack.c.bf16 %v36, %v35
    %v50 = vpack.c.bf16 %v38, %v37
    %v51 = vpack.c.bf16 %v40, %v39
    %v52 = vpack.c.bf16 %v42, %v41
    %v53 = vpack.c.bf16 %v44, %v43
    %v54 = vpack.c.bf16 %v46, %v45
    %v55 = vld [vmem:[%s1] sm:$0xf]
    %v56 = vld [vmem:[%s1 + $0x4] sm:$0xf]
    %v57 = vld [vmem:[%s1 + $0x8] sm:$0xf]
    %v58 = vld [vmem:[%s1 + $0xc] sm:$0xf]
    %v59 = vld [vmem:[%s2] sm:$0x1]
    %v61 = vlaneseq
    %v62 = vshrl.u32 %v61, 7
    %v63 = vsub.s32 0, %v62
    %v64 = vrot.slane %v59, %v63
    %v70 = vunpack.c.l.b16 %v55
    %v71 = vunpack.c.l.b16 %v56
    %v72 = vunpack.c.l.b16 %v57
    %v73 = vunpack.c.l.b16 %v58
    %v74 = vpack.c.b16 %v71, %v70
    %v75 = vpack.c.b16 %v73, %v72
    %vm78 = vcmask 261120
    %v80 = vsel %vm78, %v47, 0
    %v83 = vsel %vm78, %v48, 0
    %v86 = vsel %vm78, %v49, 0
    %v89 = vsel %vm78, %v50, 0
    %v92 = vsel %vm78, %v51, 0
    %v95 = vsel %vm78, %v52, 0
    %v98 = vsel %vm78, %v53, 0
    %v101 = vsel %vm78, %v54, 0
    %103 = vmatprep.subr.bf16.mxu0 0
    %104 = vmatpush1.bf16.msra.mxu0 %v74
    %105 = vmatprep.subr.bf16.mxu0 0
    %106 = vmatpush1.bf16.msra.mxu0 %v75
    %107 = vmatprep.subr.bf16.mxu0 0
    %108 = vmatpush1.bf16.msra.mxu0 0
    %109 = vmatprep.subr.bf16.mxu0 0
    %110 = vmatpush1.bf16.msra.mxu0 0
    %111 = vmatprep.subr.bf16.mxu0 0
    %112 = vmatpush1.bf16.msra.mxu0 0
    %113 = vmatprep.subr.bf16.mxu0 0
    %114 = vmatpush1.bf16.msra.mxu0 0
    %115 = vmatprep.subr.bf16.mxu0 0
    %116 = vmatpush1.bf16.msra.mxu0 0
    %117 = vmatprep.subr.bf16.mxu0 0
    %118 = vmatpush1.bf16.msra.mxu0 0
    %119 = vmatprep.subr.bf16.mxu0 0
    %120 = vmatpush1.bf16.msra.mxu0 0
    %121 = vmatprep.subr.bf16.mxu0 0
    %122 = vmatpush1.bf16.msra.mxu0 0
    %123 = vmatprep.subr.bf16.mxu0 0
    %124 = vmatpush1.bf16.msra.mxu0 0
    %125 = vmatprep.subr.bf16.mxu0 0
    %126 = vmatpush1.bf16.msra.mxu0 0
    %127 = vmatprep.subr.bf16.mxu0 0
    %128 = vmatpush1.bf16.msra.mxu0 0
    %129 = vmatprep.subr.bf16.mxu0 0
    %130 = vmatpush1.bf16.msra.mxu0 0
    %131 = vmatprep.subr.bf16.mxu0 0
    %132 = vmatpush1.bf16.msra.mxu0 0
    %133 = vmatprep.subr.bf16.mxu0 0
    %134 = vmatpush1.bf16.msra.mxu0 0
    %135 = vmatprep.mubr.bf16.mxu0 0
    %136 = vmatmul.mubr.bf16.gmra.mrb[0].mxu0 %v80
    %v137 = vpop.f32.mrb[0].mxu0
    %v138 = vadd.f32 %v64, %v137
    %v139 = vpop.f32.mrb[0].mxu0
    %v140 = vpop.f32.mrb[0].mxu0
    %v141 = vadd.f32 %v64, %v140
    %v142 = vpop.f32.mrb[0].mxu0
    %143 = vmatprep.mubr.bf16.mxu0 0
    %144 = vmatmul.mubr.bf16.gmra.mrb[0].mxu0 %v83
    %v145 = vpop.f32.mrb[0].mxu0
    %v146 = vadd.f32 %v64, %v145
    %v147 = vpop.f32.mrb[0].mxu0
    %v148 = vpop.f32.mrb[0].mxu0
    %v149 = vadd.f32 %v64, %v148
    %v150 = vpop.f32.mrb[0].mxu0
    %151 = vmatprep.mubr.bf16.mxu0 0
    %152 = vmatmul.mubr.bf16.gmra.mrb[0].mxu0 %v86
    %v153 = vpop.f32.mrb[0].mxu0
    %v154 = vadd.f32 %v64, %v153
    %v155 = vpop.f32.mrb[0].mxu0
    %v156 = vpop.f32.mrb[0].mxu0
    %v157 = vadd.f32 %v64, %v156
    %v158 = vpop.f32.mrb[0].mxu0
    %159 = vmatprep.mubr.bf16.mxu0 0
    %160 = vmatmul.mubr.bf16.gmra.mrb[0].mxu0 %v89
    %v161 = vpop.f32.mrb[0].mxu0
    %v162 = vadd.f32 %v64, %v161
    %v163 = vpop.f32.mrb[0].mxu0
    %v164 = vpop.f32.mrb[0].mxu0
    %v165 = vadd.f32 %v64, %v164
    %v166 = vpop.f32.mrb[0].mxu0
    %167 = vmatprep.mubr.bf16.mxu0 0
    %168 = vmatmul.mubr.bf16.gmra.mrb[0].mxu0 %v92
    %v169 = vpop.f32.mrb[0].mxu0
    %v170 = vadd.f32 %v64, %v169
    %v171 = vpop.f32.mrb[0].mxu0
    %v172 = vpop.f32.mrb[0].mxu0
    %v173 = vadd.f32 %v64, %v172
    %v174 = vpop.f32.mrb[0].mxu0
    %175 = vmatprep.mubr.bf16.mxu0 0
    %176 = vmatmul.mubr.bf16.gmra.mrb[0].mxu0 %v95
    %v177 = vpop.f32.mrb[0].mxu0
    %v178 = vadd.f32 %v64, %v177
    %v179 = vpop.f32.mrb[0].mxu0
    %v180 = vpop.f32.mrb[0].mxu0
    %v181 = vadd.f32 %v64, %v180
    %v182 = vpop.f32.mrb[0].mxu0
    %183 = vmatprep.mubr.bf16.mxu0 0
    %184 = vmatmul.mubr.bf16.gmra.mrb[0].mxu0 %v98
    %v185 = vpop.f32.mrb[0].mxu0
    %v186 = vadd.f32 %v64, %v185
    %v187 = vpop.f32.mrb[0].mxu0
    %v188 = vpop.f32.mrb[0].mxu0
    %v189 = vadd.f32 %v64, %v188
    %v190 = vpop.f32.mrb[0].mxu0
    %191 = vmatprep.mubr.bf16.mxu0 0
    %192 = vmatmul.mubr.bf16.gmra.mrb[0].mxu0 %v101
    %v193 = vpop.f32.mrb[0].mxu0
    %v194 = vadd.f32 %v64, %v193
    %v195 = vpop.f32.mrb[0].mxu0
    %v196 = vpop.f32.mrb[0].mxu0
    %v197 = vadd.f32 %v64, %v196
    %v198 = vpop.f32.mrb[0].mxu0
    %199 = vdwg.mxu0
    %v200 = vmax.f32 %v138, 0.0
    %v201 = vmax.f32 %v141, 0.0
    %v202 = vmax.f32 %v146, 0.0
    %v203 = vmax.f32 %v149, 0.0
    %v204 = vmax.f32 %v154, 0.0
    %v205 = vmax.f32 %v157, 0.0
    %v206 = vmax.f32 %v162, 0.0
    %v207 = vmax.f32 %v165, 0.0
    %v208 = vmax.f32 %v170, 0.0
    %v209 = vmax.f32 %v173, 0.0
    %v210 = vmax.f32 %v178, 0.0
    %v211 = vmax.f32 %v181, 0.0
    %v212 = vmax.f32 %v186, 0.0
    %v213 = vmax.f32 %v189, 0.0
    %v214 = vmax.f32 %v194, 0.0
    %v215 = vmax.f32 %v197, 0.0
    %v216 = vpack.c.bf16 %v201, %v200
    %v217 = vpack.c.bf16 %v203, %v202
    %v218 = vpack.c.bf16 %v205, %v204
    %v219 = vpack.c.bf16 %v207, %v206
    %v220 = vpack.c.bf16 %v209, %v208
    %v221 = vpack.c.bf16 %v211, %v210
    %v222 = vpack.c.bf16 %v213, %v212
    %v223 = vpack.c.bf16 %v215, %v214
    %v224 = vld [vmem:[%s3] sm:$0xf]
    %v225 = vld [vmem:[%s3 + $0x4] sm:$0xf]
    %v226 = vld [vmem:[%s3 + $0x8] sm:$0xf]
    %v227 = vld [vmem:[%s3 + $0xc] sm:$0xf]
    %v228 = vld [vmem:[%s3 + $0x10] sm:$0xf]
    %v229 = vld [vmem:[%s3 + $0x14] sm:$0xf]
    %v230 = vld [vmem:[%s3 + $0x18] sm:$0xf]
    %v231 = vld [vmem:[%s3 + $0x1c] sm:$0xf]
    %v232 = vld [vmem:[%s3 + $0x20] sm:$0xf]
    %v233 = vld [vmem:[%s3 + $0x24] sm:$0xf]
    %v234 = vld [vmem:[%s3 + $0x28] sm:$0xf]
    %v235 = vld [vmem:[%s3 + $0x2c] sm:$0xf]
    %v236 = vld [vmem:[%s3 + $0x30] sm:$0xf]
    %v237 = vld [vmem:[%s3 + $0x34] sm:$0xf]
    %v238 = vld [vmem:[%s3 + $0x38] sm:$0xf]
    %v239 = vld [vmem:[%s3 + $0x3c] sm:$0xf]
    %v240 = vld [vmem:[%s4] sm:$0x1]
    %v242 = vlaneseq
    %v243 = vshrl.u32 %v242, 7
    %v244 = vsub.s32 0, %v243
    %v245 = vrot.slane %v240, %v244
    %v263 = vunpack.c.l.b16 %v224
    %v264 = vunpack.c.l.b16 %v225
    %v265 = vunpack.c.l.b16 %v226
    %v266 = vunpack.c.l.b16 %v227
    %v267 = vunpack.c.l.b16 %v228
    %v268 = vunpack.c.l.b16 %v229
    %v269 = vunpack.c.l.b16 %v230
    %v270 = vunpack.c.l.b16 %v231
    %v271 = vunpack.c.l.b16 %v232
    %v272 = vunpack.c.l.b16 %v233
    %v273 = vunpack.c.l.b16 %v234
    %v274 = vunpack.c.l.b16 %v235
    %v275 = vunpack.c.l.b16 %v236
    %v276 = vunpack.c.l.b16 %v237
    %v277 = vunpack.c.l.b16 %v238
    %v278 = vunpack.c.l.b16 %v239
    %v279 = vpack.c.b16 %v264, %v263
    %v280 = vpack.c.b16 %v266, %v265
    %v281 = vpack.c.b16 %v268, %v267
    %v282 = vpack.c.b16 %v270, %v269
    %v283 = vpack.c.b16 %v272, %v271
    %v284 = vpack.c.b16 %v274, %v273
    %v285 = vpack.c.b16 %v276, %v275
    %v286 = vpack.c.b16 %v278, %v277
    %295 = vmatprep.subr.bf16.mxu0 0
    %296 = vmatpush1.bf16.msra.mxu0 %v279
    %297 = vmatprep.subr.bf16.mxu0 0
    %298 = vmatpush1.bf16.msra.mxu0 %v280
    %299 = vmatprep.subr.bf16.mxu0 0
    %300 = vmatpush1.bf16.msra.mxu0 %v281
    %301 = vmatprep.subr.bf16.mxu0 0
    %302 = vmatpush1.bf16.msra.mxu0 %v282
    %303 = vmatprep.subr.bf16.mxu0 0
    %304 = vmatpush1.bf16.msra.mxu0 %v283
    %305 = vmatprep.subr.bf16.mxu0 0
    %306 = vmatpush1.bf16.msra.mxu0 %v284
    %307 = vmatprep.subr.bf16.mxu0 0
    %308 = vmatpush1.bf16.msra.mxu0 %v285
    %309 = vmatprep.subr.bf16.mxu0 0
    %310 = vmatpush1.bf16.msra.mxu0 %v286
    %311 = vmatprep.subr.bf16.mxu0 0
    %312 = vmatpush1.bf16.msra.mxu0 0
    %313 = vmatprep.subr.bf16.mxu0 0
    %314 = vmatpush1.bf16.msra.mxu0 0
    %315 = vmatprep.subr.bf16.mxu0 0
    %316 = vmatpush1.bf16.msra.mxu0 0
    %317 = vmatprep.subr.bf16.mxu0 0
    %318 = vmatpush1.bf16.msra.mxu0 0
    %319 = vmatprep.subr.bf16.mxu0 0
    %320 = vmatpush1.bf16.msra.mxu0 0
    %321 = vmatprep.subr.bf16.mxu0 0
    %322 = vmatpush1.bf16.msra.mxu0 0
    %323 = vmatprep.subr.bf16.mxu0 0
    %324 = vmatpush1.bf16.msra.mxu0 0
    %325 = vmatprep.subr.bf16.mxu0 0
    %326 = vmatpush1.bf16.msra.mxu0 0
    %327 = vmatprep.mubr.bf16.mxu0 0
    %328 = vmatmul.mubr.bf16.gmra.mrb[0].mxu0 %v216
    %v329 = vpop.f32.mrb[0].mxu0
    %v330 = vadd.f32 %v245, %v329
    %v331 = vpop.f32.mrb[0].mxu0
    %v332 = vpop.f32.mrb[0].mxu0
    %v333 = vadd.f32 %v245, %v332
    %v334 = vpop.f32.mrb[0].mxu0
    %335 = vmatprep.mubr.bf16.mxu0 0
    %336 = vmatmul.mubr.bf16.gmra.mrb[0].mxu0 %v217
    %v337 = vpop.f32.mrb[0].mxu0
    %v338 = vadd.f32 %v245, %v337
    %v339 = vpop.f32.mrb[0].mxu0
    %v340 = vpop.f32.mrb[0].mxu0
    %v341 = vadd.f32 %v245, %v340
    %v342 = vpop.f32.mrb[0].mxu0
    %343 = vmatprep.mubr.bf16.mxu0 0
    %344 = vmatmul.mubr.bf16.gmra.mrb[0].mxu0 %v218
    %v345 = vpop.f32.mrb[0].mxu0
    %v346 = vadd.f32 %v245, %v345
    %v347 = vpop.f32.mrb[0].mxu0
    %v348 = vpop.f32.mrb[0].mxu0
    %v349 = vadd.f32 %v245, %v348
    %v350 = vpop.f32.mrb[0].mxu0
    %351 = vmatprep.mubr.bf16.mxu0 0
    %352 = vmatmul.mubr.bf16.gmra.mrb[0].mxu0 %v219
    %v353 = vpop.f32.mrb[0].mxu0
    %v354 = vadd.f32 %v245, %v353
    %v355 = vpop.f32.mrb[0].mxu0
    %v356 = vpop.f32.mrb[0].mxu0
    %v357 = vadd.f32 %v245, %v356
    %v358 = vpop.f32.mrb[0].mxu0
    %359 = vmatprep.mubr.bf16.mxu0 0
    %360 = vmatmul.mubr.bf16.gmra.mrb[0].mxu0 %v220
    %v361 = vpop.f32.mrb[0].mxu0
    %v362 = vadd.f32 %v245, %v361
    %v363 = vpop.f32.mrb[0].mxu0
    %v364 = vpop.f32.mrb[0].mxu0
    %v365 = vadd.f32 %v245, %v364
    %v366 = vpop.f32.mrb[0].mxu0
    %367 = vmatprep.mubr.bf16.mxu0 0
    %368 = vmatmul.mubr.bf16.gmra.mrb[0].mxu0 %v221
    %v369 = vpop.f32.mrb[0].mxu0
    %v370 = vadd.f32 %v245, %v369
    %v371 = vpop.f32.mrb[0].mxu0
    %v372 = vpop.f32.mrb[0].mxu0
    %v373 = vadd.f32 %v245, %v372
    %v374 = vpop.f32.mrb[0].mxu0
    %375 = vmatprep.mubr.bf16.mxu0 0
    %376 = vmatmul.mubr.bf16.gmra.mrb[0].mxu0 %v222
    %v377 = vpop.f32.mrb[0].mxu0
    %v378 = vadd.f32 %v245, %v377
    %v379 = vpop.f32.mrb[0].mxu0
    %v380 = vpop.f32.mrb[0].mxu0
    %v381 = vadd.f32 %v245, %v380
    %v382 = vpop.f32.mrb[0].mxu0
    %383 = vmatprep.mubr.bf16.mxu0 0
    %384 = vmatmul.mubr.bf16.gmra.mrb[0].mxu0 %v223
    %v385 = vpop.f32.mrb[0].mxu0
    %v386 = vadd.f32 %v245, %v385
    %v387 = vpop.f32.mrb[0].mxu0
    %v388 = vpop.f32.mrb[0].mxu0
    %v389 = vadd.f32 %v245, %v388
    %v390 = vpop.f32.mrb[0].mxu0
    %391 = vdwg.mxu0
    %v392 = vmax.f32 %v330, 0.0
    %v393 = vmax.f32 %v333, 0.0
    %v394 = vmax.f32 %v338, 0.0
    %v395 = vmax.f32 %v341, 0.0
    %v396 = vmax.f32 %v346, 0.0
    %v397 = vmax.f32 %v349, 0.0
    %v398 = vmax.f32 %v354, 0.0
    %v399 = vmax.f32 %v357, 0.0
    %v400 = vmax.f32 %v362, 0.0
    %v401 = vmax.f32 %v365, 0.0
    %v402 = vmax.f32 %v370, 0.0
    %v403 = vmax.f32 %v373, 0.0
    %v404 = vmax.f32 %v378, 0.0
    %v405 = vmax.f32 %v381, 0.0
    %v406 = vmax.f32 %v386, 0.0
    %v407 = vmax.f32 %v389, 0.0
    %v408 = vpack.c.bf16 %v393, %v392
    %v409 = vpack.c.bf16 %v395, %v394
    %v410 = vpack.c.bf16 %v397, %v396
    %v411 = vpack.c.bf16 %v399, %v398
    %v412 = vpack.c.bf16 %v401, %v400
    %v413 = vpack.c.bf16 %v403, %v402
    %v414 = vpack.c.bf16 %v405, %v404
    %v415 = vpack.c.bf16 %v407, %v406
    %v416 = vld [vmem:[%s5] sm:$0xf]
    %v417 = vld [vmem:[%s5 + $0x4] sm:$0xf]
    %v418 = vld [vmem:[%s5 + $0x8] sm:$0xf]
    %v419 = vld [vmem:[%s5 + $0xc] sm:$0xf]
    %v420 = vld [vmem:[%s5 + $0x10] sm:$0xf]
    %v421 = vld [vmem:[%s5 + $0x14] sm:$0xf]
    %v422 = vld [vmem:[%s5 + $0x18] sm:$0xf]
    %v423 = vld [vmem:[%s5 + $0x1c] sm:$0xf]
    %v424 = vld [vmem:[%s5 + $0x20] sm:$0xf]
    %v425 = vld [vmem:[%s5 + $0x24] sm:$0xf]
    %v426 = vld [vmem:[%s5 + $0x28] sm:$0xf]
    %v427 = vld [vmem:[%s5 + $0x2c] sm:$0xf]
    %v428 = vld [vmem:[%s5 + $0x30] sm:$0xf]
    %v429 = vld [vmem:[%s5 + $0x34] sm:$0xf]
    %v430 = vld [vmem:[%s5 + $0x38] sm:$0xf]
    %v431 = vld [vmem:[%s5 + $0x3c] sm:$0xf]
    %v432 = vld [vmem:[%s6] sm:$0x1]
    %v434 = vlaneseq
    %v435 = vshrl.u32 %v434, 7
    %v436 = vsub.s32 0, %v435
    %v437 = vrot.slane %v432, %v436
    %v455 = vunpack.c.l.b16 %v416
    %v456 = vunpack.c.l.b16 %v417
    %v457 = vunpack.c.l.b16 %v418
    %v458 = vunpack.c.l.b16 %v419
    %v459 = vunpack.c.l.b16 %v420
    %v460 = vunpack.c.l.b16 %v421
    %v461 = vunpack.c.l.b16 %v422
    %v462 = vunpack.c.l.b16 %v423
    %v463 = vunpack.c.l.b16 %v424
    %v464 = vunpack.c.l.b16 %v425
    %v465 = vunpack.c.l.b16 %v426
    %v466 = vunpack.c.l.b16 %v427
    %v467 = vunpack.c.l.b16 %v428
    %v468 = vunpack.c.l.b16 %v429
    %v469 = vunpack.c.l.b16 %v430
    %v470 = vunpack.c.l.b16 %v431
    %v471 = vpack.c.b16 %v456, %v455
    %v472 = vpack.c.b16 %v458, %v457
    %v473 = vpack.c.b16 %v460, %v459
    %v474 = vpack.c.b16 %v462, %v461
    %v475 = vpack.c.b16 %v464, %v463
    %v476 = vpack.c.b16 %v466, %v465
    %v477 = vpack.c.b16 %v468, %v467
    %v478 = vpack.c.b16 %v470, %v469
    %487 = vmatprep.subr.bf16.mxu0 0
    %488 = vmatpush1.bf16.msra.mxu0 %v471
    %489 = vmatprep.subr.bf16.mxu0 0
    %490 = vmatpush1.bf16.msra.mxu0 %v472
    %491 = vmatprep.subr.bf16.mxu0 0
    %492 = vmatpush1.bf16.msra.mxu0 %v473
    %493 = vmatprep.subr.bf16.mxu0 0
    %494 = vmatpush1.bf16.msra.mxu0 %v474
    %495 = vmatprep.subr.bf16.mxu0 0
    %496 = vmatpush1.bf16.msra.mxu0 %v475
    %497 = vmatprep.subr.bf16.mxu0 0
    %498 = vmatpush1.bf16.msra.mxu0 %v476
    %499 = vmatprep.subr.bf16.mxu0 0
    %500 = vmatpush1.bf16.msra.mxu0 %v477
    %501 = vmatprep.subr.bf16.mxu0 0
    %502 = vmatpush1.bf16.msra.mxu0 %v478
    %503 = vmatprep.subr.bf16.mxu0 0
    %504 = vmatpush1.bf16.msra.mxu0 0
    %505 = vmatprep.subr.bf16.mxu0 0
    %506 = vmatpush1.bf16.msra.mxu0 0
    %507 = vmatprep.subr.bf16.mxu0 0
    %508 = vmatpush1.bf16.msra.mxu0 0
    %509 = vmatprep.subr.bf16.mxu0 0
    %510 = vmatpush1.bf16.msra.mxu0 0
    %511 = vmatprep.subr.bf16.mxu0 0
    %512 = vmatpush1.bf16.msra.mxu0 0
    %513 = vmatprep.subr.bf16.mxu0 0
    %514 = vmatpush1.bf16.msra.mxu0 0
    %515 = vmatprep.subr.bf16.mxu0 0
    %516 = vmatpush1.bf16.msra.mxu0 0
    %517 = vmatprep.subr.bf16.mxu0 0
    %518 = vmatpush1.bf16.msra.mxu0 0
    %519 = vmatprep.mubr.bf16.mxu0 0
    %520 = vmatmul.mubr.bf16.gmra.mrb[0].mxu0 %v408
    %v521 = vpop.f32.mrb[0].mxu0
    %v522 = vadd.f32 %v437, %v521
    %v523 = vpop.f32.mrb[0].mxu0
    %v524 = vpop.f32.mrb[0].mxu0
    %v525 = vadd.f32 %v437, %v524
    %v526 = vpop.f32.mrb[0].mxu0
    %527 = vmatprep.mubr.bf16.mxu0 0
    %528 = vmatmul.mubr.bf16.gmra.mrb[0].mxu0 %v409
    %v529 = vpop.f32.mrb[0].mxu0
    %v530 = vadd.f32 %v437, %v529
    %v531 = vpop.f32.mrb[0].mxu0
    %v532 = vpop.f32.mrb[0].mxu0
    %v533 = vadd.f32 %v437, %v532
    %v534 = vpop.f32.mrb[0].mxu0
    %535 = vmatprep.mubr.bf16.mxu0 0
    %536 = vmatmul.mubr.bf16.gmra.mrb[0].mxu0 %v410
    %v537 = vpop.f32.mrb[0].mxu0
    %v538 = vadd.f32 %v437, %v537
    %v539 = vpop.f32.mrb[0].mxu0
    %v540 = vpop.f32.mrb[0].mxu0
    %v541 = vadd.f32 %v437, %v540
    %v542 = vpop.f32.mrb[0].mxu0
    %543 = vmatprep.mubr.bf16.mxu0 0
    %544 = vmatmul.mubr.bf16.gmra.mrb[0].mxu0 %v411
    %v545 = vpop.f32.mrb[0].mxu0
    %v546 = vadd.f32 %v437, %v545
    %v547 = vpop.f32.mrb[0].mxu0
    %v548 = vpop.f32.mrb[0].mxu0
    %v549 = vadd.f32 %v437, %v548
    %v550 = vpop.f32.mrb[0].mxu0
    %551 = vmatprep.mubr.bf16.mxu0 0
    %552 = vmatmul.mubr.bf16.gmra.mrb[0].mxu0 %v412
    %v553 = vpop.f32.mrb[0].mxu0
    %v554 = vadd.f32 %v437, %v553
    %v555 = vpop.f32.mrb[0].mxu0
    %v556 = vpop.f32.mrb[0].mxu0
    %v557 = vadd.f32 %v437, %v556
    %v558 = vpop.f32.mrb[0].mxu0
    %559 = vmatprep.mubr.bf16.mxu0 0
    %560 = vmatmul.mubr.bf16.gmra.mrb[0].mxu0 %v413
    %v561 = vpop.f32.mrb[0].mxu0
    %v562 = vadd.f32 %v437, %v561
    %v563 = vpop.f32.mrb[0].mxu0
    %v564 = vpop.f32.mrb[0].mxu0
    %v565 = vadd.f32 %v437, %v564
    %v566 = vpop.f32.mrb[0].mxu0
    %567 = vmatprep.mubr.bf16.mxu0 0
    %568 = vmatmul.mubr.bf16.gmra.mrb[0].mxu0 %v414
    %v569 = vpop.f32.mrb[0].mxu0
    %v570 = vadd.f32 %v437, %v569
    %v571 = vpop.f32.mrb[0].mxu0
    %v572 = vpop.f32.mrb[0].mxu0
    %v573 = vadd.f32 %v437, %v572
    %v574 = vpop.f32.mrb[0].mxu0
    %575 = vmatprep.mubr.bf16.mxu0 0
    %576 = vmatmul.mubr.bf16.gmra.mrb[0].mxu0 %v415
    %v577 = vpop.f32.mrb[0].mxu0
    %v578 = vadd.f32 %v437, %v577
    %v579 = vpop.f32.mrb[0].mxu0
    %v580 = vpop.f32.mrb[0].mxu0
    %v581 = vadd.f32 %v437, %v580
    %v582 = vpop.f32.mrb[0].mxu0
    %583 = vdwg.mxu0
    %v584 = vmax.f32 %v522, 0.0
    %v585 = vmax.f32 %v525, 0.0
    %v586 = vmax.f32 %v530, 0.0
    %v587 = vmax.f32 %v533, 0.0
    %v588 = vmax.f32 %v538, 0.0
    %v589 = vmax.f32 %v541, 0.0
    %v590 = vmax.f32 %v546, 0.0
    %v591 = vmax.f32 %v549, 0.0
    %v592 = vmax.f32 %v554, 0.0
    %v593 = vmax.f32 %v557, 0.0
    %v594 = vmax.f32 %v562, 0.0
    %v595 = vmax.f32 %v565, 0.0
    %v596 = vmax.f32 %v570, 0.0
    %v597 = vmax.f32 %v573, 0.0
    %v598 = vmax.f32 %v578, 0.0
    %v599 = vmax.f32 %v581, 0.0
    %v600 = vld [vmem:[%s7] sm:$0x1]
    %v601 = vpack.c.bf16 %v585, %v584
    %v602 = vpack.c.bf16 %v587, %v586
    %v603 = vpack.c.bf16 %v589, %v588
    %v604 = vpack.c.bf16 %v591, %v590
    %v605 = vpack.c.bf16 %v593, %v592
    %v606 = vpack.c.bf16 %v595, %v594
    %v607 = vpack.c.bf16 %v597, %v596
    %v608 = vpack.c.bf16 %v599, %v598
    %609 = vmatprep.subr.bf16.mxu0 0
    %610 = vmatpush1.bf16.xpose.msra.mxu0 %v601
    %611 = vmatprep.subr.bf16.mxu0 0
    %612 = vmatpush1.bf16.xpose.msra.mxu0 %v602
    %613 = vmatprep.subr.bf16.mxu0 0
    %614 = vmatpush1.bf16.xpose.msra.mxu0 %v603
    %615 = vmatprep.subr.bf16.mxu0 0
    %616 = vmatpush1.bf16.xpose.msra.mxu0 %v604
    %617 = vmatprep.subr.bf16.mxu0 0
    %618 = vmatpush1.bf16.xpose.msra.mxu0 %v605
    %619 = vmatprep.subr.bf16.mxu0 0
    %620 = vmatpush1.bf16.xpose.msra.mxu0 %v606
    %621 = vmatprep.subr.bf16.mxu0 0
    %622 = vmatpush1.bf16.xpose.msra.mxu0 %v607
    %623 = vmatprep.subr.bf16.mxu0 0
    %624 = vmatpush1.bf16.xpose.msra.mxu0 %v608
    %625 = vmatprep.subr.bf16.mxu0 0
    %626 = vmatpush1.bf16.xpose.msra.mxu0 0
    %627 = vmatprep.subr.bf16.mxu0 0
    %628 = vmatpush1.bf16.xpose.msra.mxu0 0
    %629 = vmatprep.subr.bf16.mxu0 0
    %630 = vmatpush1.bf16.xpose.msra.mxu0 0
    %631 = vmatprep.subr.bf16.mxu0 0
    %632 = vmatpush1.bf16.xpose.msra.mxu0 0
    %633 = vmatprep.subr.bf16.mxu0 0
    %634 = vmatpush1.bf16.xpose.msra.mxu0 0
    %635 = vmatprep.subr.bf16.mxu0 0
    %636 = vmatpush1.bf16.xpose.msra.mxu0 0
    %637 = vmatprep.subr.bf16.mxu0 0
    %638 = vmatpush1.bf16.xpose.msra.mxu0 0
    %639 = vmatprep.subr.bf16.mxu0 0
    %640 = vmatpush1.bf16.xpose.msra.mxu0 0
    %641 = vmatprep.mubr.bf16.mxu0 0
    %642 = vmatmul.mubr.bf16.gmra.mrb[0].mxu0 %v600
    %v643 = vpop.f32.mrb[0].mxu0
    %v644 = vadd.f32 0.0, %v643
    %v645 = vpop.f32.mrb[0].mxu0
    %v646 = vpop.f32.mrb[0].mxu0
    %v647 = vpop.f32.mrb[0].mxu0
    %648 = vdwg.mxu0
    %v649 = vand.u32 2147483647, %v644
    %v650 = vsub.f32 0.0, %v649
    %v651 = vmul.f32 %v650, 1.442695
    %v652 = vpow.pop %v651
    %v653 = vadd.f32 %v652, 1.0
    %v654 = vrcp.pop %v653
    %v655 = vmul.f32 1.0, %v654
    %vm656 = vcmp.ge.f32.partialorder %v644, 0.0
    %v657 = vmul.f32 %v652, %v655
    %v658 = vsel %vm656, %v655, %v657
    %659 = vst [vmem:[#allocation2] sm:$0x1] %v658
    // Predicated region
    $region34: #{tpu_custom_call.1} parent=1 // pred_check
      _
    $region35: #{tpu_custom_call.1} parent=1 // pred_check_branch
      %661 = sbr.rel (0) target = $region37
    $region36: #{tpu_custom_call.1} parent=1 // pred_region
      %s663 = ssub.s32 16, 16
      %664 = vsyncadd [#allocation3], %s663
      %s666 = sshll.u32 [#allocation2], 4
      %s667 = int_to_ptr.vmem [resolvable:$true] %s666
      %669 = dma.vmem_to_hbm [thread:$0]  %s667, 16, %s8, [#allocation3]
    $region37: #{tpu_custom_call.1} parent=1 // pred_fallthru
      _
    // Predicated region
    $region38: #{tpu_custom_call.1} parent=1 // pred_check
      _
    $region39: #{tpu_custom_call.1} parent=1 // pred_check_branch
      %671 = sbr.rel (0) target = $region41
    $region40: #{tpu_custom_call.1} parent=1 // pred_region
      %672 = dma.done [#allocation3], 16
    $region41: #{tpu_custom_call.1} parent=1 // pred_fallthru
      _
    %673 = vsyncpa [#allocation3], 1

</llo_original>
